<compile_context>
chip_gen: v7x
topology: tpu7x:2x2x1
jax: 0.10.0
libtpu: 0.0.40
codegen_flags: <defaults>
</compile_context>

<pallas_src>
import functools

import jax
import jax.numpy as jnp
from jax import lax
from jax.experimental import pallas as pl
from jax.experimental.pallas import tpu as pltpu
from jax.scipy.linalg import cho_solve

LENGTHSCALE = 1.0
OUTPUTSCALE = 1.0
INV_LS2 = 1.0 / (LENGTHSCALE * LENGTHSCALE)
DIAG_CLAMP = 1e-6

TILE_N = 256                    # 128-multiple: lane-dense, MXU-friendly, v7x-VMEM-safe
VMEM_LIMIT = 32 * 1024 * 1024   # explicit scoped VMEM limit (safe on v5e/v6e/v7x)


# -----------------------------------------------------------------------------
# helpers
# -----------------------------------------------------------------------------
def _round_up(n, m):
    return ((n + m - 1) // m) * m


def _choose_tile(n, pref=TILE_N):
    """Return (tile, padded_n) with tile a 128-multiple that divides padded_n."""
    n_pad = _round_up(n, 128)
    if n_pad <= pref:
        return n_pad, n_pad
    n_pad = _round_up(n, pref)
    return pref, n_pad


def _pad_rows(x, target):
    n = x.shape[0]
    if n == target:
        return x
    return jnp.pad(x, ((0, target - n), (0, 0)))


def _sq_norm_row(x):
    """(1, T) row of squared L2 norms of rows of x (no transposes needed)."""
    ones = jnp.ones((1, x.shape[1]), jnp.float32)
    return lax.dot_general(ones, x * x, (((1,), (1,)), ((), ())),
                           preferred_element_type=jnp.float32)


def _rbf_block(a, b):
    """exp(-0.5 * ||a_i - b_j||^2) for row-major a (NA, D), b (NB, D)."""
    a2 = jnp.sum(a * a, axis=-1, keepdims=True)                      # (NA, 1) lane reduce
    b2 = _sq_norm_row(b)                                             # (1, NB)
    ab = lax.dot_general(a, b, (((1,), (1,)), ((), ())),             # (NA, NB) MXU
                         preferred_element_type=jnp.float32)
    d2 = jnp.maximum(a2 + b2 - 2.0 * ab, 0.0)
    return OUTPUTSCALE * jnp.exp(-0.5 * d2 * INV_LS2)


# -----------------------------------------------------------------------------
# Kernel 1: tiled RBF Gram  k(a, b)  (a kept resident, b / output tiled over rows)
# -----------------------------------------------------------------------------
def _rbf_gram_kernel(a_ref, b_ref, o_ref):
    o_ref[...] = _rbf_block(a_ref[...], b_ref[...])


def _rbf_gram_tiled(a, b_pad, tb):
    na, d = a.shape
    nb_pad = b_pad.shape[0]
    return pl.pallas_call(
        _rbf_gram_kernel,
        out_shape=jax.ShapeDtypeStruct((na, nb_pad), jnp.float32),
        grid=(nb_pad // tb,),
        in_specs=[pl.BlockSpec((na, d), lambda j: (0, 0)),
                  pl.BlockSpec((tb, d), lambda j: (j, 0))],
        out_specs=pl.BlockSpec((na, tb), lambda j: (0, j)),
        compiler_params=pltpu.CompilerParams(
            dimension_semantics=("parallel",),
            vmem_limit_bytes=VMEM_LIMIT),
    )(a, b_pad)


def rbf_gram(a, b):
    """k(a, b) with shape (a.shape[0], b.shape[0]); first operand kept resident."""
    a = jnp.asarray(a, jnp.float32)
    b = jnp.asarray(b, jnp.float32)
    tb, nb_pad = _choose_tile(b.shape[0])
    out = _rbf_gram_tiled(a, _pad_rows(b, nb_pad), tb)
    return out[:, :b.shape[0]]


# -----------------------------------------------------------------------------
# Kernel 2 (one-shot, tiny): B = L_masked @ L_masked^T - inv_Z
#   with L_masked = ensure_pos_diag(tril(L_param) + reg * I)
# -----------------------------------------------------------------------------
def _prep_b_kernel(reg, L_ref, invZ_ref, b_ref):
    m = L_ref.shape[0]
    row = lax.broadcasted_iota(jnp.int32, (m, m), 0)
    col = lax.broadcasted_iota(jnp.int32, (m, m), 1)
    eye = row == col
    L = jnp.where(row >= col, L_ref[...], 0.0)
    L = L + jnp.where(eye, jnp.float32(reg), 0.0)
    L = jnp.where(eye, jnp.maximum(L, DIAG_CLAMP), L)
    llt = lax.dot_general(L, L, (((1,), (1,)), ((), ())),            # L @ L^T
                          preferred_element_type=jnp.float32)
    b_ref[...] = llt - invZ_ref[...]


# -----------------------------------------------------------------------------
# Kernel 3: fused RBF + projection, tiled over N1:
#   kzx_tile = k(Z, x1_tile)           (M, T1)
#   wt_tile  = B @ kzx_tile            (M, T1)
# -----------------------------------------------------------------------------
def _rbf_project_kernel(z_ref, b_ref, x_ref, kzx_ref, wt_ref):
    kzx = _rbf_block(z_ref[...], x_ref[...])
    kzx_ref[...] = kzx
    wt_ref[...] = jnp.dot(b_ref[...], kzx, preferred_element_type=jnp.float32)


# -----------------------------------------------------------------------------
# Kernel 4: 2-D tiled forward:
#   out_tile = rbf(x1_tile, x2_tile) + WT_tile^T @ kzx2_tile
# -----------------------------------------------------------------------------
def _forward_kernel(x1_ref, x2_ref, wt_ref, kzx2_ref, o_ref):
    kx1x2 = _rbf_block(x1_ref[...], x2_ref[...])                     # (T1, T2), fused RBF
    corr = lax.dot_general(wt_ref[...], kzx2_ref[...],               # contract over M
                           (((0,), (0,)), ((), ())),
                           preferred_element_type=jnp.float32)       # (T1, T2)
    o_ref[...] = kx1x2 + corr


# -----------------------------------------------------------------------------
# Module wrapper (plain-JAX glue + deterministic init mirroring init_L)
# -----------------------------------------------------------------------------
class RParamCholeskyScaling:
    def __init__(self, Z, X, sigma, scale_init=1.0):
        self.Z = jnp.asarray(Z, jnp.float32)
        self.X = jnp.asarray(X, jnp.float32)
        self.sigma = float(sigma)
        # `scale` is a parameter in the torch module but is unused in forward().
        self.scale = jnp.ones((1,), jnp.float32) * scale_init
        self.eye = jnp.eye(self.Z.shape[0], dtype=jnp.float32)
        self.cap = 0.1
        self._init_L()

    def _init_L(self):
        # Mirrors torch init_L: the last reg that factorizes wins -> reg = 1e-2
        # for well-conditioned PSD matrices (all attempts succeed in torch).
        kzz = rbf_gram(self.Z, self.Z)
        kzx = rbf_gram(self.Z, self.X)
        reg = 1e-2
        A = kzz + kzx @ kzx.T / self.sigma + self.eye * reg
        chol_L = jnp.linalg.cholesky(A)
        A_inv = cho_solve((chol_L, True), self.eye)          # torch.cholesky_inverse
        self.L = jnp.linalg.cholesky(A_inv)                  # parameter
        self.reg = reg
        inv_L = jnp.linalg.cholesky(kzz + self.eye * self.reg)
        self.inv_Z = cho_solve((inv_L, True), self.eye)      # buffer

    def _prep_B(self):
        m = self.Z.shape[0]
        return pl.pallas_call(
            functools.partial(_prep_b_kernel, self.reg),
            out_shape=jax.ShapeDtypeStruct((m, m), jnp.float32),
            grid=(1,),
            in_specs=[pl.BlockSpec((m, m), lambda i: (0, 0)),
                      pl.BlockSpec((m, m), lambda i: (0, 0))],
            out_specs=pl.BlockSpec((m, m), lambda i: (0, 0)),
        )(self.L, self.inv_Z)

    def forward(self, x1, x2=None):
        x1 = jnp.asarray(x1, jnp.float32)
        n1, d = x1.shape
        m = self.Z.shape[0]

        # --- one-shot small preprocessing (hoisted out of the tiled hot path) ---
        B = self._prep_B()                                    # (M, M) = L L^T - inv_Z

        t1, n1_pad = _choose_tile(n1)
        x1_p = _pad_rows(x1, n1_pad)

        # kzx1 (consumed only when x2 is None) and WT = B @ k(Z, x1), fused, tiled on N1.
        kzx1_p, wt_p = pl.pallas_call(
            _rbf_project_kernel,
            out_shape=(jax.ShapeDtypeStruct((m, n1_pad), jnp.float32),
                       jax.ShapeDtypeStruct((m, n1_pad), jnp.float32)),
            grid=(n1_pad // t1,),
            in_specs=[pl.BlockSpec((m, d), lambda i: (0, 0)),
                      pl.BlockSpec((m, m), lambda i: (0, 0)),
                      pl.BlockSpec((t1, d), lambda i: (i, 0))],
            out_specs=(pl.BlockSpec((m, t1), lambda i: (0, i)),
                       pl.BlockSpec((m, t1), lambda i: (0, i))),
            compiler_params=pltpu.CompilerParams(
                dimension_semantics=("parallel",),
                vmem_limit_bytes=VMEM_LIMIT),
        )(self.Z, B, x1_p)

        if x2 is None:
            n2, t2, n2_pad = n1, t1, n1_pad
            x2_p = x1_p
            kzx2_p = kzx1_p                                   # reuse: no duplicate Gram
        else:
            x2 = jnp.asarray(x2, jnp.float32)
            n2 = x2.shape[0]
            t2, n2_pad = _choose_tile(n2)
            x2_p = _pad_rows(x2, n2_pad)
            kzx2_p = _rbf_gram_tiled(self.Z, x2_p, t2)        # (M, N2_pad)

        # --- main 2-D tiled, pipelined kernel: k(x1,x2) fused in-kernel ---
        out_p = pl.pallas_call(
            _forward_kernel,
            out_shape=jax.ShapeDtypeStruct((n1_pad, n2_pad), jnp.float32),
            grid=(n1_pad // t1, n2_pad // t2),
            in_specs=[pl.BlockSpec((t1, d), lambda i, j: (i, 0)),
                      pl.BlockSpec((t2, d), lambda i, j: (j, 0)),
                      pl.BlockSpec((m, t1), lambda i, j: (0, i)),
                      pl.BlockSpec((m, t2), lambda i, j: (0, j))],
            out_specs=pl.BlockSpec((t1, t2), lambda i, j: (i, j)),
            compiler_params=pltpu.CompilerParams(
                dimension_semantics=("parallel", "parallel"),
                vmem_limit_bytes=VMEM_LIMIT),
        )(x1_p, x2_p, wt_p, kzx2_p)

        return out_p[:n1, :n2]


# -----------------------------------------------------------------------------
# Pure-JAX reference (original, un-refactored formula) for correctness check
# -----------------------------------------------------------------------------
def _ref_rbf(a, b):
    d2 = jnp.maximum(
        jnp.sum(a * a, 1)[:, None] + jnp.sum(b * b, 1)[None, :] - 2.0 * a @ b.T, 0.0
    )
    return OUTPUTSCALE * jnp.exp(-0.5 * d2 * INV_LS2)


def reference_forward(model, x1, x2=None):
    m = model.L.shape[0]
    L = jnp.tril(model.L) + model.eye * model.reg
    v = jnp.maximum(jnp.diag(L), DIAG_CLAMP)
    L = jnp.where(jnp.eye(m, dtype=bool), jnp.diag(v), L)
    x2_ = x1 if x2 is None else x2
    kzx1 = _ref_rbf(model.Z, x1)
    kzx2 = _ref_rbf(model.Z, x2_)
    t = L.T @ kzx2
    sol = model.inv_Z @ kzx2
    return _ref_rbf(x1, x2_) - kzx1.T @ sol + (kzx1.T @ L) @ t


if __name__ == "__main__":
    key = jax.random.PRNGKey(0)
    kz, kx, k1, k2, k3, k4 = jax.random.split(key, 6)
    M, N, D = 8, 16, 4          # inducing points, data points, feature dim
    Z = jax.random.normal(kz, (M, D), jnp.float32)
    X = jax.random.normal(kx, (N, D), jnp.float32)
    x1 = jax.random.normal(k1, (16, D), jnp.float32)
    x2 = jax.random.normal(k2, (12, D), jnp.float32)

    model = RParamCholeskyScaling(Z, X, sigma=0.1, scale_init=1.0)

    out1 = model.forward(x1)          # x2=None branch -> (16, 16), single-tile grid
    out2 = model.forward(x1, x2)      # x2 branch      -> (16, 12), single-tile grid

    # Slightly larger inputs to exercise the multi-tile (2x2) pipelined grid path.
    x1_big = jax.random.normal(k3, (300, D), jnp.float32)
    x2_big = jax.random.normal(k4, (260, D), jnp.float32)
    out3 = model.forward(x1_big, x2_big)    # (300, 260)
    out4 = model.forward(x1_big)            # (300, 300)

    jax.block_until_ready((out1, out2, out3, out4))

    ref1 = reference_forward(model, x1)
    ref2 = reference_forward(model, x1, x2)
    ref3 = reference_forward(model, x1_big, x2_big)
    ref4 = reference_forward(model, x1_big)

    assert out1.shape == (16, 16) and out2.shape == (16, 12)
    assert out3.shape == (300, 260) and out4.shape == (300, 300)
    for o, r, name in ((out1, ref1, "x2=None small"), (out2, ref2, "x2 small"),
                       (out3, ref3, "x2 big"), (out4, ref4, "x2=None big")):
        assert jnp.allclose(o, r, atol=2e-4, rtol=2e-4), f"mismatch: {name}"

    print("KERNEL_OK")
</pallas_src>

<mosaic_0001>
module attributes {stable_mosaic.version = 11 : i64} {
  func.func @_rbf_gram_kernel(%arg0: i32, %arg1: memref<8x4xf32, #tpu.memory_space<vmem>>, %arg2: memref<128x4xf32, #tpu.memory_space<vmem>>, %arg3: memref<8x128xf32, #tpu.memory_space<vmem>>) attributes {dimension_semantics = [#tpu.dimension_semantics<parallel>], iteration_bounds = array<i64: 1>, scalar_prefetch = 0 : i64, scratch_operands = 0 : i64, tpu.core_type = #tpu.core_type<tc>, window_params = [{pipeline_mode = #tpu.pipeline_mode<synchronous>, transform_indices = @transform_0, window_bounds = array<i64: 8, 4>}, {transform_indices = @transform_1, window_bounds = array<i64: 128, 4>}, {transform_indices = @transform_2, window_bounds = array<i64: 8, 128>}]} {
    %c0 = arith.constant 0 : index
    %c0_0 = arith.constant 0 : index
    %0 = vector.load %arg1[%c0, %c0_0] : memref<8x4xf32, #tpu.memory_space<vmem>>, vector<8x4xf32>
    %c0_1 = arith.constant 0 : index
    %c0_2 = arith.constant 0 : index
    %1 = vector.load %arg2[%c0_1, %c0_2] : memref<128x4xf32, #tpu.memory_space<vmem>>, vector<128x4xf32>
    %2 = arith.mulf %0, %0 : vector<8x4xf32>
    %cst = arith.constant dense<0.000000e+00> : vector<8xf32>
    %3 = vector.multi_reduction <add>, %2, %cst [1] : vector<8x4xf32> to vector<8xf32>
    %4 = vector.shape_cast %3 : vector<8xf32> to vector<8x1xf32>
    %cst_3 = arith.constant 1.000000e+00 : f32
    %5 = vector.broadcast %cst_3 : f32 to vector<1x4xf32>
    %6 = arith.mulf %1, %1 : vector<128x4xf32>
    %cst_4 = arith.constant dense<0.000000e+00> : vector<1x128xf32>
    %7 = tpu.matmul %5, %6, %cst_4 {dimension_numbers = #tpu.dot_dimension_numbers<[1], [1], [0], [0], [0, 0, 1, 0], [], []>} : vector<1x4xf32>, vector<128x4xf32>, vector<1x128xf32> -> vector<1x128xf32>
    %cst_5 = arith.constant dense<0.000000e+00> : vector<8x128xf32>
    %8 = tpu.matmul %0, %1, %cst_5 {dimension_numbers = #tpu.dot_dimension_numbers<[1], [1], [0], [0], [0, 0, 1, 0], [], []>} : vector<8x4xf32>, vector<128x4xf32>, vector<8x128xf32> -> vector<8x128xf32>
    %9 = vector.broadcast %4 : vector<8x1xf32> to vector<8x128xf32>
    %10 = vector.broadcast %7 : vector<1x128xf32> to vector<8x128xf32>
    %11 = arith.addf %9, %10 : vector<8x128xf32>
    %cst_6 = arith.constant 2.000000e+00 : f32
    %12 = vector.broadcast %cst_6 : f32 to vector<8x128xf32>
    %13 = arith.mulf %12, %8 : vector<8x128xf32>
    %14 = arith.subf %11, %13 : vector<8x128xf32>
    %cst_7 = arith.constant 0.000000e+00 : f32
    %15 = vector.broadcast %cst_7 : f32 to vector<8x128xf32>
    %16 = arith.maximumf %14, %15 : vector<8x128xf32>
    %cst_8 = arith.constant -5.000000e-01 : f32
    %17 = vector.broadcast %cst_8 : f32 to vector<8x128xf32>
    %18 = arith.mulf %17, %16 : vector<8x128xf32>
    %cst_9 = arith.constant 1.000000e+00 : f32
    %19 = vector.broadcast %cst_9 : f32 to vector<8x128xf32>
    %20 = arith.mulf %18, %19 : vector<8x128xf32>
    %21 = math.exp %20 : vector<8x128xf32>
    %cst_10 = arith.constant 1.000000e+00 : f32
    %22 = vector.broadcast %cst_10 : f32 to vector<8x128xf32>
    %23 = arith.mulf %22, %21 : vector<8x128xf32>
    %c0_11 = arith.constant 0 : index
    %c0_12 = arith.constant 0 : index
    %24 = vector.load %arg3[%c0_11, %c0_12] : memref<8x128xf32, #tpu.memory_space<vmem>>, vector<8x128xf32>
    tpu.vector_store %arg3[%c0_11, %c0_12], %23 {strides = array<i32>} : memref<8x128xf32, #tpu.memory_space<vmem>>, vector<8x128xf32>,
    return
  }
  func.func @transform_0(%arg0: i32) -> (i32, i32) {
    %c0_i32 = arith.constant 0 : i32
    %c0_i32_0 = arith.constant 0 : i32
    %c0_i32_1 = arith.constant 0 : i32
    return %c0_i32, %c0_i32_0 : i32, i32
  }
  func.func @transform_1(%arg0: i32) -> (i32, i32) {
    %c0_i32 = arith.constant 0 : i32
    %c0_i32_0 = arith.constant 0 : i32
    return %arg0, %c0_i32 : i32, i32
  }
  func.func @transform_2(%arg0: i32) -> (i32, i32) {
    %c0_i32 = arith.constant 0 : i32
    %c0_i32_0 = arith.constant 0 : i32
    return %c0_i32, %arg0 : i32, i32
  }
}

</mosaic_0001>

<llo_original>
// kernel: tpu_custom_call.1
$region0: #{tpu_custom_call.1}
  #allocation0 [shape = 'u32[]', space=smem, size = 0x4, offset = 0x4, fixed_abs, tag = 'smem constant byte address 0x4 - core index']
  #allocation1 [shape = 'u32[144,128]{1,0:T(1,128)}', space=vmem, size = 0x12000, scoped, tag = 'internal scratch']
  %s0 = inlined_call_operand.vmem [shape: f32[8,4], index: 0, kind: input, shape index: {}]
  %s1 = inlined_call_operand.vmem [shape: f32[128,4], index: 1, kind: input, shape index: {}]
  %s2 = inlined_call_operand.hbm [shape: f32[8,128], index: 2, kind: output, shape index: {}]
  %s3 = sld [smem:[#allocation0]]
  $region18: #{tpu_custom_call.1} parent=0
    _
  %s5 = ssub.s32 1, %s3
  %s6 = scalar_select 0, %s5, %s3
  $region1: #{tpu_custom_call.1} parent=0
    #allocation2 [shape = 'u8[4096]{0}', space=vmem, size = 0x1000, scoped, tag = 'output window, operand 0, single buffered']
    #allocation3 [shape = 's32[1]{0}', space=sflag, size = 0x4, scoped, tag = 'scoped memory for tpu_custom_call.1']
    %7 = vsyncpa [#allocation3], 0
    // Predicated region
    $region2: #{tpu_custom_call.1} parent=1 // pred_check
      _
    $region3: #{tpu_custom_call.1} parent=1 // pred_check_branch
      %9 = sbr.rel (0) target = $region5
    $region4: #{tpu_custom_call.1} parent=1 // pred_region
      _
    $region5: #{tpu_custom_call.1} parent=1 // pred_fallthru
      _
    // Predicated region
    $region6: #{tpu_custom_call.1} parent=1 // pred_check
      _
    $region7: #{tpu_custom_call.1} parent=1 // pred_check_branch
      %11 = sbr.rel (0) target = $region9
    $region8: #{tpu_custom_call.1} parent=1 // pred_region
      _
    $region9: #{tpu_custom_call.1} parent=1 // pred_fallthru
      _
    %v12 = vld [vmem:[%s0] sm:$0xff]
    %v13 = vld [vmem:[%s1] sm:$0xff]
    %v14 = vld [vmem:[%s1 + $0x8] sm:$0xff]
    %v15 = vld [vmem:[%s1 + $0x10] sm:$0xff]
    %v16 = vld [vmem:[%s1 + $0x18] sm:$0xff]
    %v17 = vld [vmem:[%s1 + $0x20] sm:$0xff]
    %v18 = vld [vmem:[%s1 + $0x28] sm:$0xff]
    %v19 = vld [vmem:[%s1 + $0x30] sm:$0xff]
    %v20 = vld [vmem:[%s1 + $0x38] sm:$0xff]
    %v21 = vld [vmem:[%s1 + $0x40] sm:$0xff]
    %v22 = vld [vmem:[%s1 + $0x48] sm:$0xff]
    %v23 = vld [vmem:[%s1 + $0x50] sm:$0xff]
    %v24 = vld [vmem:[%s1 + $0x58] sm:$0xff]
    %v25 = vld [vmem:[%s1 + $0x60] sm:$0xff]
    %v26 = vld [vmem:[%s1 + $0x68] sm:$0xff]
    %v27 = vld [vmem:[%s1 + $0x70] sm:$0xff]
    %v28 = vld [vmem:[%s1 + $0x78] sm:$0xff]
    %v29 = vmul.f32 %v12, %v12
    %vm30 = vcmask 31744
    %v31 = vsel %vm30, %v29, 0.0
    %32 = vadd.xlane.f32.xlu0 %v31
    %v33 = vpop.xlane.xlu0 %32
    %v34 = vmul.f32 %v13, %v13
    %v35 = vmul.f32 %v14, %v14
    %v36 = vmul.f32 %v15, %v15
    %v37 = vmul.f32 %v16, %v16
    %v38 = vmul.f32 %v17, %v17
    %v39 = vmul.f32 %v18, %v18
    %v40 = vmul.f32 %v19, %v19
    %v41 = vmul.f32 %v20, %v20
    %v42 = vmul.f32 %v21, %v21
    %v43 = vmul.f32 %v22, %v22
    %v44 = vmul.f32 %v23, %v23
    %v45 = vmul.f32 %v24, %v24
    %v46 = vmul.f32 %v25, %v25
    %v47 = vmul.f32 %v26, %v26
    %v48 = vmul.f32 %v27, %v27
    %v49 = vmul.f32 %v28, %v28
    %v51 = vsel %vm30, 1.0, 0
    %v54 = vsel %vm30, %v34, 0
    %v57 = vsel %vm30, %v35, 0
    %v60 = vsel %vm30, %v36, 0
    %v63 = vsel %vm30, %v37, 0
    %v66 = vsel %vm30, %v38, 0
    %v69 = vsel %vm30, %v39, 0
    %v72 = vsel %vm30, %v40, 0
    %v75 = vsel %vm30, %v41, 0
    %v78 = vsel %vm30, %v42, 0
    %v81 = vsel %vm30, %v43, 0
    %v84 = vsel %vm30, %v44, 0
    %v87 = vsel %vm30, %v45, 0
    %v90 = vsel %vm30, %v46, 0
    %v93 = vsel %vm30, %v47, 0
    %v96 = vsel %vm30, %v48, 0
    %v99 = vsel %vm30, %v49, 0
    %101 = vmatprep.subr.mxu0 0.0
    %102 = vmatpush1.xpose.msra.mxu0 %v54
    %103 = vmatprep.subr.mxu0 0.0
    %104 = vmatpush1.xpose.msra.mxu0 %v57
    %105 = vmatprep.subr.mxu0 0.0
    %106 = vmatpush1.xpose.msra.mxu0 %v60
    %107 = vmatprep.subr.mxu0 0.0
    %108 = vmatpush1.xpose.msra.mxu0 %v63
    %109 = vmatprep.subr.mxu0 0.0
    %110 = vmatpush1.xpose.msra.mxu0 %v66
    %111 = vmatprep.subr.mxu0 0.0
    %112 = vmatpush1.xpose.msra.mxu0 %v69
    %113 = vmatprep.subr.mxu0 0.0
    %114 = vmatpush1.xpose.msra.mxu0 %v72
    %115 = vmatprep.subr.mxu0 0.0
    %116 = vmatpush1.xpose.msra.mxu0 %v75
    %117 = vmatprep.subr.mxu0 0.0
    %118 = vmatpush1.xpose.msra.mxu0 %v78
    %119 = vmatprep.subr.mxu0 0.0
    %120 = vmatpush1.xpose.msra.mxu0 %v81
    %121 = vmatprep.subr.mxu0 0.0
    %122 = vmatpush1.xpose.msra.mxu0 %v84
    %123 = vmatprep.subr.mxu0 0.0
    %124 = vmatpush1.xpose.msra.mxu0 %v87
    %125 = vmatprep.subr.mxu0 0.0
    %126 = vmatpush1.xpose.msra.mxu0 %v90
    %127 = vmatprep.subr.mxu0 0.0
    %128 = vmatpush1.xpose.msra.mxu0 %v93
    %129 = vmatprep.subr.mxu0 0.0
    %130 = vmatpush1.xpose.msra.mxu0 %v96
    %131 = vmatprep.subr.mxu0 0.0
    %132 = vmatpush1.xpose.msra.mxu0 %v99
    %133 = vmatprep.subr.mxu0 0.0
    %134 = vmatpush1.xpose.msra.mxu0 0.0
    %135 = vmatprep.subr.mxu0 0.0
    %136 = vmatpush1.xpose.msra.mxu0 0.0
    %137 = vmatprep.subr.mxu0 0.0
    %138 = vmatpush1.xpose.msra.mxu0 0.0
    %139 = vmatprep.subr.mxu0 0.0
    %140 = vmatpush1.xpose.msra.mxu0 0.0
    %141 = vmatprep.subr.mxu0 0.0
    %142 = vmatpush1.xpose.msra.mxu0 0.0
    %143 = vmatprep.subr.mxu0 0.0
    %144 = vmatpush1.xpose.msra.mxu0 0.0
    %145 = vmatprep.subr.mxu0 0.0
    %146 = vmatpush1.xpose.msra.mxu0 0.0
    %147 = vmatprep.subr.mxu0 0.0
    %148 = vmatpush1.xpose.msra.mxu0 0.0
    %149 = vmatprep.subr.mxu0 0.0
    %150 = vmatpush1.xpose.msra.mxu0 0.0
    %151 = vmatprep.subr.mxu0 0.0
    %152 = vmatpush1.xpose.msra.mxu0 0.0
    %153 = vmatprep.subr.mxu0 0.0
    %154 = vmatpush1.xpose.msra.mxu0 0.0
    %155 = vmatprep.subr.mxu0 0.0
    %156 = vmatpush1.xpose.msra.mxu0 0.0
    %157 = vmatprep.subr.mxu0 0.0
    %158 = vmatpush1.xpose.msra.mxu0 0.0
    %159 = vmatprep.subr.mxu0 0.0
    %160 = vmatpush1.xpose.msra.mxu0 0.0
    %161 = vmatprep.subr.mxu0 0.0
    %162 = vmatpush1.xpose.msra.mxu0 0.0
    %163 = vmatprep.subr.mxu0 0.0
    %164 = vmatpush1.xpose.msra.mxu0 0.0
    %165 = vmatprep.mubr.f32.mxu0 0.0
    %166 = vmatmul.mubr.f32.gmra.mrb[0].mxu0 %v51
    %v167 = vpop.f32.mrb[0].mxu0
    %v168 = vadd.f32 0.0, %v167
    %v169 = vpop.f32.mrb[0].mxu0
    %170 = vdwg.mxu0
    %v172 = vsel %vm30, %v12, 0
    %v175 = vsel %vm30, %v13, 0
    %v178 = vsel %vm30, %v14, 0
    %v181 = vsel %vm30, %v15, 0
    %v184 = vsel %vm30, %v16, 0
    %v187 = vsel %vm30, %v17, 0
    %v190 = vsel %vm30, %v18, 0
    %v193 = vsel %vm30, %v19, 0
    %v196 = vsel %vm30, %v20, 0
    %v199 = vsel %vm30, %v21, 0
    %v202 = vsel %vm30, %v22, 0
    %v205 = vsel %vm30, %v23, 0
    %v208 = vsel %vm30, %v24, 0
    %v211 = vsel %vm30, %v25, 0
    %v214 = vsel %vm30, %v26, 0
    %v217 = vsel %vm30, %v27, 0
    %v220 = vsel %vm30, %v28, 0
    %222 = vmatprep.subr.mxu0 0.0
    %223 = vmatpush1.xpose.msra.mxu0 %v175
    %224 = vmatprep.subr.mxu0 0.0
    %225 = vmatpush1.xpose.msra.mxu0 %v178
    %226 = vmatprep.subr.mxu0 0.0
    %227 = vmatpush1.xpose.msra.mxu0 %v181
    %228 = vmatprep.subr.mxu0 0.0
    %229 = vmatpush1.xpose.msra.mxu0 %v184
    %230 = vmatprep.subr.mxu0 0.0
    %231 = vmatpush1.xpose.msra.mxu0 %v187
    %232 = vmatprep.subr.mxu0 0.0
    %233 = vmatpush1.xpose.msra.mxu0 %v190
    %234 = vmatprep.subr.mxu0 0.0
    %235 = vmatpush1.xpose.msra.mxu0 %v193
    %236 = vmatprep.subr.mxu0 0.0
    %237 = vmatpush1.xpose.msra.mxu0 %v196
    %238 = vmatprep.subr.mxu0 0.0
    %239 = vmatpush1.xpose.msra.mxu0 %v199
    %240 = vmatprep.subr.mxu0 0.0
    %241 = vmatpush1.xpose.msra.mxu0 %v202
    %242 = vmatprep.subr.mxu0 0.0
    %243 = vmatpush1.xpose.msra.mxu0 %v205
    %244 = vmatprep.subr.mxu0 0.0
    %245 = vmatpush1.xpose.msra.mxu0 %v208
    %246 = vmatprep.subr.mxu0 0.0
    %247 = vmatpush1.xpose.msra.mxu0 %v211
    %248 = vmatprep.subr.mxu0 0.0
    %249 = vmatpush1.xpose.msra.mxu0 %v214
    %250 = vmatprep.subr.mxu0 0.0
    %251 = vmatpush1.xpose.msra.mxu0 %v217
    %252 = vmatprep.subr.mxu0 0.0
    %253 = vmatpush1.xpose.msra.mxu0 %v220
    %254 = vmatprep.subr.mxu0 0.0
    %255 = vmatpush1.xpose.msra.mxu0 0.0
    %256 = vmatprep.subr.mxu0 0.0
    %257 = vmatpush1.xpose.msra.mxu0 0.0
    %258 = vmatprep.subr.mxu0 0.0
    %259 = vmatpush1.xpose.msra.mxu0 0.0
    %260 = vmatprep.subr.mxu0 0.0
    %261 = vmatpush1.xpose.msra.mxu0 0.0
    %262 = vmatprep.subr.mxu0 0.0
    %263 = vmatpush1.xpose.msra.mxu0 0.0
    %264 = vmatprep.subr.mxu0 0.0
    %265 = vmatpush1.xpose.msra.mxu0 0.0
    %266 = vmatprep.subr.mxu0 0.0
    %267 = vmatpush1.xpose.msra.mxu0 0.0
    %268 = vmatprep.subr.mxu0 0.0
    %269 = vmatpush1.xpose.msra.mxu0 0.0
    %270 = vmatprep.subr.mxu0 0.0
    %271 = vmatpush1.xpose.msra.mxu0 0.0
    %272 = vmatprep.subr.mxu0 0.0
    %273 = vmatpush1.xpose.msra.mxu0 0.0
    %274 = vmatprep.subr.mxu0 0.0
    %275 = vmatpush1.xpose.msra.mxu0 0.0
    %276 = vmatprep.subr.mxu0 0.0
    %277 = vmatpush1.xpose.msra.mxu0 0.0
    %278 = vmatprep.subr.mxu0 0.0
    %279 = vmatpush1.xpose.msra.mxu0 0.0
    %280 = vmatprep.subr.mxu0 0.0
    %281 = vmatpush1.xpose.msra.mxu0 0.0
    %282 = vmatprep.subr.mxu0 0.0
    %283 = vmatpush1.xpose.msra.mxu0 0.0
    %284 = vmatprep.subr.mxu0 0.0
    %285 = vmatpush1.xpose.msra.mxu0 0.0
    %286 = vmatprep.mubr.f32.mxu0 0.0
    %287 = vmatmul.mubr.f32.gmra.mrb[0].mxu0 %v172
    %v288 = vpop.f32.mrb[0].mxu0
    %v289 = vadd.f32 0.0, %v288
    %v290 = vpop.f32.mrb[0].mxu0
    %291 = vdwg.mxu0
    %v292 = vlaneseq
    %v293 = vshrl.u32 %v292, 7
    %v294 = vsub.s32 0, %v293
    %v295 = vrot.slane %v168, %v294
    %v296 = vadd.f32 %v33, %v295
    %v297 = vmul.f32 %v289, 2.0
    %v298 = vsub.f32 %v296, %v297
    %v299 = vmax.f32 %v298, 0.0
    %v300 = vmul.f32 %v299, -0.5
    %v301 = vmul.f32 %v300, 1.442695
    %v302 = vpow.pop %v301
    %303 = vst [vmem:[#allocation2] sm:$0xff] %v302
    // Predicated region
    $region10: #{tpu_custom_call.1} parent=1 // pred_check
      _
    $region11: #{tpu_custom_call.1} parent=1 // pred_check_branch
      %305 = sbr.rel (0) target = $region13
    $region12: #{tpu_custom_call.1} parent=1 // pred_region
      %s307 = ssub.s32 128, 128
      %308 = vsyncadd [#allocation3], %s307
      %s310 = sshll.u32 [#allocation2], 4
      %s311 = int_to_ptr.vmem [resolvable:$true] %s310
      %313 = dma.vmem_to_hbm [thread:$0]  %s311, 128, %s2, [#allocation3]
    $region13: #{tpu_custom_call.1} parent=1 // pred_fallthru
      _
    // Predicated region
    $region14: #{tpu_custom_call.1} parent=1 // pred_check
      _
    $region15: #{tpu_custom_call.1} parent=1 // pred_check_branch
      %315 = sbr.rel (0) target = $region17
    $region16: #{tpu_custom_call.1} parent=1 // pred_region
      %316 = dma.done [#allocation3], 128
    $region17: #{tpu_custom_call.1} parent=1 // pred_fallthru
      _
    %317 = vsyncpa [#allocation3], 1

</llo_original>
